<compile_context>
chip_gen: v5e
topology: v5e:2x2
jax: 0.10.0
libtpu: 0.0.40
codegen_flags: <defaults>
</compile_context>

<pallas_src>
import functools
import math

import jax
import jax.numpy as jnp
from jax.experimental import pallas as pl
from jax.experimental.pallas import tpu as pltpu


def _gamma_kernel(gamma_ref, x_ref, o_ref):
    # gamma_ref: (1, 1) f32 scalar in SMEM.
    # x_ref/o_ref: (tile_r, lanes) lane-dense tiles in VMEM, native dtype.
    g = gamma_ref[0, 0]
    x = x_ref[...].astype(jnp.float32)
    # x ** g computed as exp(g * log(x)) on the EUP (free slot vs the HBM
    # roofline).  Valid on the raw-sensor domain x >= 0 with g > 0:
    # log(0) -> -inf -> exp -> 0, matching torch 0 ** g for g > 0.
    # TODO(synk): negative x with integer-valued gamma (torch-defined) is not
    # reproduced; preprocessing inputs are assumed >= 0.
    o_ref[...] = jnp.exp(g * jnp.log(x)).astype(o_ref.dtype)


def _round_up_8(v):
    return -(-v // 8) * 8


@functools.partial(jax.jit, static_argnames=("lanes", "tile_r", "pad", "donate"))
def _gamma_call(x, g, *, lanes, tile_r, pad, donate):
    orig_shape = x.shape
    flat = x.reshape(-1)                      # contiguous reshape: free
    if pad:
        # TODO(synk): pad/slice each cost a full HBM pass; only hit when
        # numel is not a multiple of 128.
        flat = jnp.pad(flat, (0, pad))
    rows = flat.shape[0] // lanes
    x2 = flat.reshape(rows, lanes)            # lane-dense (rows, lanes)

    grid = (pl.cdiv(rows, tile_r),)           # last block may be partial

    out2 = pl.pallas_call(
        _gamma_kernel,
        out_shape=jax.ShapeDtypeStruct((rows, lanes), x.dtype),
        grid_spec=pl.GridSpec(
            grid=grid,
            in_specs=[
                pl.BlockSpec(memory_space=pltpu.SMEM),            # gamma
                pl.BlockSpec((tile_r, lanes), lambda i: (i, 0)),  # x tile
            ],
            out_specs=pl.BlockSpec((tile_r, lanes), lambda i: (i, 0)),
        ),
        compiler_params=pltpu.CompilerParams(
            dimension_semantics=("parallel",),
            vmem_limit_bytes=32 * 1024 * 1024,
        ),
        input_output_aliases=({1: 0} if donate else {}),
    )(g, x2)

    flat_out = out2.reshape(-1)
    if pad:
        flat_out = flat_out[: flat_out.shape[0] - pad]
    return flat_out.reshape(orig_shape)


def preproc_gamma(x, gamma, *, max_block_elems=2048 * 512, donate=False):
    """Elementwise x ** gamma for NCHW (or any-shape) float input."""
    if not jnp.issubdtype(x.dtype, jnp.floating):
        x = x.astype(jnp.float32)

    # Cheap fast paths when gamma is a concrete Python scalar.
    if isinstance(gamma, (int, float)):
        if gamma == 0.0:
            return jnp.ones_like(x)           # matches torch 0 ** 0 == 1
        if gamma == 1.0:
            return x
        if gamma == 2.0:
            return x * x                       # VPU only, no transcendentals

    n = x.size
    # Pick a lane width that divides numel so no pad/slice passes are needed.
    lanes = next((l for l in (512, 256, 128) if n % l == 0), None)
    pad = 0
    if lanes is None:
        lanes = 128
        pad = (-n) % lanes

    rows = (n + pad) // lanes

    if rows <= 8:
        tile_r = rows                          # full-dim block (tiny inputs)
    else:
        cap = max(8, (max_block_elems // lanes) // 8 * 8)   # ~4 MiB f32 block
        tile_r = min(cap, rows)
        # Ensure >= 2 grid steps so v7x's two TensorCores both get work.
        tile_r = min(tile_r, _round_up_8(-(-rows // 2)))

    g = jnp.asarray(gamma, jnp.float32).reshape(1, 1)
    return _gamma_call(x, g, lanes=lanes, tile_r=tile_r, pad=pad, donate=donate)


if __name__ == "__main__":
    key = jax.random.PRNGKey(0)

    # preproc_params: gamma used in forward; mean/std stored but unused.
    preproc_params = {"gamma": 0.45, "mean": 0.0, "std": 1.0}
    gamma = preproc_params["gamma"]

    # Spec shape: NCHW image batch.
    B, C, H, W = 2, 4, 16, 16
    x = jax.random.uniform(key, (B, C, H, W), jnp.float32, 0.0, 1023.0)

    out = preproc_gamma(x, gamma)
    out = jax.block_until_ready(out)
    ref = jnp.power(x, jnp.float32(gamma))
    assert out.shape == (B, C, H, W)
    assert out.dtype == x.dtype
    assert jnp.allclose(out, ref, atol=1e-5, rtol=1e-5)

    # Exercise the multi-step / masked-last-block path (rows=60, tile_r=32).
    x2 = jax.random.uniform(jax.random.PRNGKey(1), (2, 4, 60, 64),
                            jnp.float32, 0.0, 1023.0)
    out2 = jax.block_until_ready(preproc_gamma(x2, gamma))
    ref2 = jnp.power(x2, jnp.float32(gamma))
    assert jnp.allclose(out2, ref2, atol=1e-5, rtol=1e-5)

    print("KERNEL_OK")
</pallas_src>

<mosaic_0001>
module attributes {stable_mosaic.version = 11 : i64} {
  func.func @_gamma_kernel(%arg0: i32, %arg1: memref<1x1xf32, #tpu.memory_space<smem>>, %arg2: memref<4x512xf32, #tpu.memory_space<vmem>>, %arg3: memref<4x512xf32, #tpu.memory_space<vmem>>) attributes {dimension_semantics = [#tpu.dimension_semantics<parallel>], iteration_bounds = array<i64: 1>, scalar_prefetch = 0 : i64, scratch_operands = 0 : i64, tpu.core_type = #tpu.core_type<tc>, window_params = [{transform_indices = @transform_0, window_bounds = array<i64: 1, 1>}, {transform_indices = @transform_1, window_bounds = array<i64: 4, 512>}, {transform_indices = @transform_2, window_bounds = array<i64: 4, 512>}]} {
    %c0 = arith.constant 0 : index
    %c0_0 = arith.constant 0 : index
    %0 = memref.load %arg1[%c0, %c0_0] : memref<1x1xf32, #tpu.memory_space<smem>>
    %c0_1 = arith.constant 0 : index
    %c0_2 = arith.constant 0 : index
    %1 = vector.load %arg2[%c0_1, %c0_2] : memref<4x512xf32, #tpu.memory_space<vmem>>, vector<4x512xf32>
    %2 = math.log %1 : vector<4x512xf32>
    %3 = vector.broadcast %0 : f32 to vector<4x512xf32>
    %4 = arith.mulf %3, %2 : vector<4x512xf32>
    %5 = math.exp %4 : vector<4x512xf32>
    %c0_3 = arith.constant 0 : index
    %c0_4 = arith.constant 0 : index
    %6 = vector.load %arg3[%c0_3, %c0_4] : memref<4x512xf32, #tpu.memory_space<vmem>>, vector<4x512xf32>
    tpu.vector_store %arg3[%c0_3, %c0_4], %5 {strides = array<i32>} : memref<4x512xf32, #tpu.memory_space<vmem>>, vector<4x512xf32>,
    return
  }
  func.func @transform_0(%arg0: i32) -> (i32, i32) {
    %c0_i32 = arith.constant 0 : i32
    %c0_i32_0 = arith.constant 0 : i32
    %c0_i32_1 = arith.constant 0 : i32
    return %c0_i32, %c0_i32_0 : i32, i32
  }
  func.func @transform_1(%arg0: i32) -> (i32, i32) {
    %c0_i32 = arith.constant 0 : i32
    %c0_i32_0 = arith.constant 0 : i32
    return %arg0, %c0_i32 : i32, i32
  }
  func.func @transform_2(%arg0: i32) -> (i32, i32) {
    %c0_i32 = arith.constant 0 : i32
    %c0_i32_0 = arith.constant 0 : i32
    return %arg0, %c0_i32 : i32, i32
  }
}

</mosaic_0001>

<llo_original>
// kernel: _gamma_call.1
$region0: #{_gamma_call.1}
  #allocation0 [shape = 'u32[]', space=smem, size = 0x4, offset = 0x4, fixed_abs, tag = 'smem constant byte address 0x4 - core index']
  #allocation1 [shape = 'u32[72,128]{1,0:T(1,128)}', space=vmem, size = 0x9000, scoped, tag = 'internal scratch']
  #allocation2 [shape = 'f32[1,1]{1,0:T(1,128)S(6)}', space=smem, size = 0x200, scoped, tag = 'scoped memory for _gamma_call.1']
  %s0 = inlined_call_operand.<no memory space> [shape: f32[1,1], index: 0, kind: input, shape index: {}]
  %s1 = inlined_call_operand.vmem [shape: f32[4,512], index: 1, kind: input, shape index: {}]
  %s2 = inlined_call_operand.vmem [shape: f32[4,512], index: 2, kind: output, shape index: {}]
  %s3 = sld [smem:[#allocation0]]
  $region18: #{_gamma_call.1} parent=0
    _
  %s5 = ssub.s32 1, %s3
  %s6 = scalar_select 0, %s5, %s3
  %7 = sst [smem:[#allocation2]] %s0
  // Predicated region
  $region2: #{_gamma_call.1} parent=0 // pred_check
    _
  $region3: #{_gamma_call.1} parent=0 // pred_check_branch
    %9 = sbr.rel (0) target = $region5
  $region4: #{_gamma_call.1} parent=0 // pred_region
    _
  $region5: #{_gamma_call.1} parent=0 // pred_fallthru
    _
  // Predicated region
  $region6: #{_gamma_call.1} parent=0 // pred_check
    _
  $region7: #{_gamma_call.1} parent=0 // pred_check_branch
    %11 = sbr.rel (0) target = $region9
  $region8: #{_gamma_call.1} parent=0 // pred_region
    _
  $region9: #{_gamma_call.1} parent=0 // pred_fallthru
    _
  %s12 = sld [smem:[#allocation2]]
  %v13 = vld [vmem:[%s1] sm:$0xff]
  %v14 = vld [vmem:[%s1 + $0x8] sm:$0xff]
  %v15 = vlog2.pop %v13
  %v16 = vmul.f32 %v15, 0.6931472
  %v17 = vlog2.pop %v14
  %v18 = vmul.f32 %v17, 0.6931472
  %v19 = vstv %s12
  %v20 = vmul.f32 %v19, %v16
  %v21 = vmul.f32 %v19, %v18
  %v22 = vmul.f32 %v20, 1.442695
  %v23 = vpow.pop %v22
  %v24 = vmul.f32 %v21, 1.442695
  %v25 = vpow.pop %v24
  %26 = vst [vmem:[%s2] sm:$0xff] %v23
  %27 = vst [vmem:[%s2 + $0x8] sm:$0xff] %v25
  // Predicated region
  $region10: #{_gamma_call.1} parent=0 // pred_check
    _
  $region11: #{_gamma_call.1} parent=0 // pred_check_branch
    %29 = sbr.rel (0) target = $region13
  $region12: #{_gamma_call.1} parent=0 // pred_region
    _
  $region13: #{_gamma_call.1} parent=0 // pred_fallthru
    _
  // Predicated region
  $region14: #{_gamma_call.1} parent=0 // pred_check
    _
  $region15: #{_gamma_call.1} parent=0 // pred_check_branch
    %31 = sbr.rel (0) target = $region17
  $region16: #{_gamma_call.1} parent=0 // pred_region
    _
  $region17: #{_gamma_call.1} parent=0 // pred_fallthru
    _

</llo_original>
